<compile_context>
chip_gen: v6e
topology: v6e:2x2x1
jax: 0.10.0
libtpu: 0.0.40
codegen_flags: <defaults>
</compile_context>

<pallas_src>
import functools

import jax
import jax.numpy as jnp
from jax.experimental import pallas as pl
from jax.experimental.pallas import tpu as pltpu

LANES = 128
SUBLANES = 8
# Per-input, per-pipeline-buffer block budget (bytes). 2 inputs x 2 buffers
# -> <= 8 MiB of streaming buffers: safe on v5e/v6e (128 MiB VMEM) and on
# v7x (64 MiB VMEM) while still large enough to sit near the HBM roofline.
_MAX_BLOCK_BYTES = 2 * 1024 * 1024


def _round_up(x, m):
    return ((x + m - 1) // m) * m


def _soft_dice_kernel(x_ref, t_ref, out_ref, inter_acc, s1_acc, s2_acc):
    """Grid: axis 0 = sample (parallel), axis 1 = row-tile (reduction)."""
    k = pl.program_id(1)

    # Re-initialize the per-sample accumulators at the start of each sample's
    # reduction sweep.
    @pl.when(k == 0)
    def _init():
        inter_acc[...] = jnp.zeros_like(inter_acc)
        s1_acc[...] = jnp.zeros_like(s1_acc)
        s2_acc[...] = jnp.zeros_like(s2_acc)

    x = x_ref[0].astype(jnp.float32)          # (rows_tile, 128)
    t = t_ref[0].astype(jnp.float32)          # (rows_tile, 128)

    # sigmoid(x) = 0.5 * tanh(0.5 x) + 0.5  -> single EUP transcendental.
    # Padded logits are -1e9 -> tanh saturates to -1 -> prob exactly 0, and
    # padded targets are 0, so padding contributes nothing to any sum.
    probs = 0.5 * jnp.tanh(0.5 * x) + 0.5

    # Lane-resident partial sums: reduce only the sublane (row) axis here.
    inter_acc[...] += jnp.sum(probs * t, axis=0, keepdims=True)   # (1, 128)
    s1_acc[...] += jnp.sum(probs, axis=0, keepdims=True)          # (1, 128)
    s2_acc[...] += jnp.sum(t, axis=0, keepdims=True)              # (1, 128)

    # Finalize this sample: cross-lane reduce once, compute dice score.
    @pl.when(k == pl.num_programs(1) - 1)
    def _finalize():
        smooth = jnp.float32(1.0)
        inter = jnp.sum(inter_acc[...])
        s1 = jnp.sum(s1_acc[...])
        s2 = jnp.sum(s2_acc[...])
        score = 2.0 * (inter + smooth) / (s1 + s2 + smooth)
        out_ref[...] = jnp.full(out_ref.shape, score, dtype=jnp.float32)


@functools.partial(jax.jit, static_argnames=("rows_per_tile", "stream_dtype"))
def soft_dice_loss(logits, targets, *, rows_per_tile=None, stream_dtype=None):
    """SoftDiceLoss forward. logits/targets: (N, C, H, W). Returns f32 scalar.

    stream_dtype: dtype used to stream the inputs through HBM.  Defaults to
    the logits' native floating dtype (no wrapper-side recast pass).  All
    in-kernel math is f32 regardless.
    """
    n = logits.shape[0]
    d = 1
    for s in logits.shape[1:]:
        d *= s

    if stream_dtype is None:
        stream = (logits.dtype if jnp.issubdtype(logits.dtype, jnp.inexact)
                  else jnp.float32)
    else:
        stream = jnp.dtype(stream_dtype)
    itemsize = jnp.dtype(stream).itemsize

    # ---- tile selection (VMEM-aware) ----
    rows = pl.cdiv(d, LANES)                       # rows of 128 lanes per sample
    cap = max(SUBLANES,
              (_MAX_BLOCK_BYTES // (LANES * itemsize)) // SUBLANES * SUBLANES)
    if rows_per_tile is None:
        num_tiles = pl.cdiv(rows, cap)
        rows_tile = _round_up(pl.cdiv(rows, num_tiles), SUBLANES)
    else:
        rows_tile = _round_up(max(int(rows_per_tile), 1), SUBLANES)
        num_tiles = pl.cdiv(rows, rows_tile)
    r_pad = num_tiles * rows_tile
    d_pad = r_pad * LANES

    # ---- flatten, (optional) cast for streaming, pad, lane-dense reshape ----
    logits_flat = logits.reshape(n, d).astype(stream)
    targets_flat = targets.reshape(n, d).astype(stream)
    if d_pad != d:
        # Padded logits -> -1e9 (sigmoid == 0), padded targets -> 0: padding
        # contributes exactly nothing, so no in-kernel mask is required.
        logits_flat = jnp.pad(logits_flat, ((0, 0), (0, d_pad - d)),
                              constant_values=-1e9)
        targets_flat = jnp.pad(targets_flat, ((0, 0), (0, d_pad - d)),
                               constant_values=0)
    x3 = logits_flat.reshape(n, r_pad, LANES)
    t3 = targets_flat.reshape(n, r_pad, LANES)

    grid = (n, r_pad // rows_tile)

    # 2 inputs x 2 pipeline buffers of the streaming blocks + headroom.
    in_block_bytes = rows_tile * LANES * itemsize
    vmem_limit_bytes = int(max(32 << 20, 4 * in_block_bytes + (8 << 20)))

    out = pl.pallas_call(
        _soft_dice_kernel,
        out_shape=jax.ShapeDtypeStruct((n, SUBLANES, LANES), jnp.float32),
        grid_spec=pltpu.PrefetchScalarGridSpec(
            num_scalar_prefetch=0,
            grid=grid,
            in_specs=[
                pl.BlockSpec((1, rows_tile, LANES), lambda i, k: (i, k, 0)),
                pl.BlockSpec((1, rows_tile, LANES), lambda i, k: (i, k, 0)),
            ],
            # Per-sample score, broadcast into an (8,128)-aligned block so the
            # output BlockSpec stays tile-aligned; wrapper reads [:, 0, 0].
            out_specs=pl.BlockSpec((1, SUBLANES, LANES),
                                   lambda i, k: (i, 0, 0)),
            scratch_shapes=[
                pltpu.VMEM((1, LANES), jnp.float32),   # intersection partials
                pltpu.VMEM((1, LANES), jnp.float32),   # sum(probs) partials
                pltpu.VMEM((1, LANES), jnp.float32),   # sum(targets) partials
            ],
        ),
        compiler_params=pltpu.CompilerParams(
            dimension_semantics=("parallel", "arbitrary"),
            vmem_limit_bytes=vmem_limit_bytes,
        ),
    )(x3, t3)

    scores = out[:, 0, 0]                       # (N,)
    return (1.0 - jnp.sum(scores) / jnp.float32(n)).astype(jnp.float32)


def _reference(logits, targets):
    """Pure-JAX reference matching the PyTorch module."""
    n = logits.shape[0]
    probs = jax.nn.sigmoid(logits.astype(jnp.float32)).reshape(n, -1)
    m2 = targets.astype(jnp.float32).reshape(n, -1)
    inter = jnp.sum(probs * m2, axis=1)
    score = 2.0 * (inter + 1.0) / (jnp.sum(probs, axis=1) +
                                   jnp.sum(m2, axis=1) + 1.0)
    return 1.0 - jnp.sum(score) / n


if __name__ == "__main__":
    key = jax.random.PRNGKey(0)
    k1, k2, k3, k4 = jax.random.split(key, 4)

    # Case 1: spec shape (N=2, C=4, H=W=16), default tiling, native f32 stream.
    N, C, H, W = 2, 4, 16, 16
    logits = jax.random.normal(k1, (N, C, H, W), dtype=jnp.float32)
    targets = (jax.random.uniform(k2, (N, C, H, W)) > 0.5).astype(jnp.float32)

    loss = soft_dice_loss(logits, targets)
    jax.block_until_ready(loss)
    ref = _reference(logits, targets)
    assert jnp.allclose(loss, ref, atol=1e-5, rtol=1e-5), (loss, ref)

    # Case 2: D not a multiple of 128 (exercises padding path) and a forced
    # small tile (exercises multi-step accumulation over the reduction axis).
    N2, C2, H2, W2 = 2, 3, 31, 33
    logits2 = jax.random.normal(k3, (N2, C2, H2, W2), dtype=jnp.float32)
    targets2 = (jax.random.uniform(k4, (N2, C2, H2, W2)) > 0.5).astype(
        jnp.float32)

    loss2 = soft_dice_loss(logits2, targets2, rows_per_tile=8)
    jax.block_until_ready(loss2)
    ref2 = _reference(logits2, targets2)
    assert jnp.allclose(loss2, ref2, atol=1e-5, rtol=1e-5), (loss2, ref2)

    # Case 3: optional reduced-precision streaming path (bf16-native inputs).
    logits3 = logits.astype(jnp.bfloat16)
    loss3 = soft_dice_loss(logits3, targets, stream_dtype=jnp.bfloat16)
    jax.block_until_ready(loss3)
    ref3 = _reference(logits3, targets)
    assert jnp.allclose(loss3, ref3, atol=1e-4, rtol=1e-4), (loss3, ref3)

    print("KERNEL_OK")
</pallas_src>

<mosaic_0001>
module attributes {stable_mosaic.version = 11 : i64} {
  func.func @_soft_dice_kernel(%arg0: i32, %arg1: i32, %arg2: memref<1x8x128xf32, #tpu.memory_space<vmem>>, %arg3: memref<1x8x128xf32, #tpu.memory_space<vmem>>, %arg4: memref<1x8x128xf32, #tpu.memory_space<vmem>>, %arg5: memref<1x128xf32, #tpu.memory_space<vmem>>, %arg6: memref<1x128xf32, #tpu.memory_space<vmem>>, %arg7: memref<1x128xf32, #tpu.memory_space<vmem>>) attributes {dimension_semantics = [#tpu.dimension_semantics<parallel>, #tpu.dimension_semantics<arbitrary>], iteration_bounds = array<i64: 2, 1>, scalar_prefetch = 0 : i64, scratch_operands = 3 : i64, tpu.core_type = #tpu.core_type<tc>, window_params = [{transform_indices = @transform_0, window_bounds = array<i64: 1, 8, 128>}, {transform_indices = @transform_1, window_bounds = array<i64: 1, 8, 128>}, {transform_indices = @transform_2, window_bounds = array<i64: 1, 8, 128>}]} {
    %c0_i32 = arith.constant 0 : i32
    %0 = arith.cmpi eq, %arg1, %c0_i32 : i32
    %1 = arith.extui %0 : i1 to i32
    %c0_i32_0 = arith.constant 0 : i32
    %2 = arith.cmpi ne, %1, %c0_i32_0 : i32
    scf.if %2 {
      %cst_25 = arith.constant 0.000000e+00 : f32
      %33 = vector.broadcast %cst_25 : f32 to vector<1x128xf32>
      %c0_26 = arith.constant 0 : index
      %c0_27 = arith.constant 0 : index
      %34 = vector.load %arg5[%c0_26, %c0_27] : memref<1x128xf32, #tpu.memory_space<vmem>>, vector<1x128xf32>
      tpu.vector_store %arg5[%c0_26, %c0_27], %33 {strides = array<i32>} : memref<1x128xf32, #tpu.memory_space<vmem>>, vector<1x128xf32>,
      %cst_28 = arith.constant 0.000000e+00 : f32
      %35 = vector.broadcast %cst_28 : f32 to vector<1x128xf32>
      %c0_29 = arith.constant 0 : index
      %c0_30 = arith.constant 0 : index
      %36 = vector.load %arg6[%c0_29, %c0_30] : memref<1x128xf32, #tpu.memory_space<vmem>>, vector<1x128xf32>
      tpu.vector_store %arg6[%c0_29, %c0_30], %35 {strides = array<i32>} : memref<1x128xf32, #tpu.memory_space<vmem>>, vector<1x128xf32>,
      %cst_31 = arith.constant 0.000000e+00 : f32
      %37 = vector.broadcast %cst_31 : f32 to vector<1x128xf32>
      %c0_32 = arith.constant 0 : index
      %c0_33 = arith.constant 0 : index
      %38 = vector.load %arg7[%c0_32, %c0_33] : memref<1x128xf32, #tpu.memory_space<vmem>>, vector<1x128xf32>
      tpu.vector_store %arg7[%c0_32, %c0_33], %37 {strides = array<i32>} : memref<1x128xf32, #tpu.memory_space<vmem>>, vector<1x128xf32>,
    } else {
    }
    %c0 = arith.constant 0 : index
    %c0_1 = arith.constant 0 : index
    %c0_2 = arith.constant 0 : index
    %3 = vector.load %arg2[%c0, %c0_1, %c0_2] : memref<1x8x128xf32, #tpu.memory_space<vmem>>, vector<1x8x128xf32>
    %4 = vector.shape_cast %3 : vector<1x8x128xf32> to vector<8x128xf32>
    %c0_3 = arith.constant 0 : index
    %c0_4 = arith.constant 0 : index
    %c0_5 = arith.constant 0 : index
    %5 = vector.load %arg3[%c0_3, %c0_4, %c0_5] : memref<1x8x128xf32, #tpu.memory_space<vmem>>, vector<1x8x128xf32>
    %6 = vector.shape_cast %5 : vector<1x8x128xf32> to vector<8x128xf32>
    %cst = arith.constant 5.000000e-01 : f32
    %7 = vector.broadcast %cst : f32 to vector<8x128xf32>
    %8 = arith.mulf %7, %4 : vector<8x128xf32>
    %9 = math.tanh %8 : vector<8x128xf32>
    %cst_6 = arith.constant 5.000000e-01 : f32
    %10 = vector.broadcast %cst_6 : f32 to vector<8x128xf32>
    %11 = arith.mulf %10, %9 : vector<8x128xf32>
    %cst_7 = arith.constant 5.000000e-01 : f32
    %12 = vector.broadcast %cst_7 : f32 to vector<8x128xf32>
    %13 = arith.addf %11, %12 : vector<8x128xf32>
    %c0_8 = arith.constant 0 : index
    %c0_9 = arith.constant 0 : index
    %14 = vector.load %arg5[%c0_8, %c0_9] : memref<1x128xf32, #tpu.memory_space<vmem>>, vector<1x128xf32>
    %15 = arith.mulf %13, %6 : vector<8x128xf32>
    %cst_10 = arith.constant dense<0.000000e+00> : vector<128xf32>
    %16 = vector.multi_reduction <add>, %15, %cst_10 [0] : vector<8x128xf32> to vector<128xf32>
    %17 = vector.shape_cast %16 : vector<128xf32> to vector<1x128xf32>
    %18 = arith.addf %14, %17 : vector<1x128xf32>
    %c0_11 = arith.constant 0 : index
    %c0_12 = arith.constant 0 : index
    %19 = vector.load %arg5[%c0_11, %c0_12] : memref<1x128xf32, #tpu.memory_space<vmem>>, vector<1x128xf32>
    tpu.vector_store %arg5[%c0_11, %c0_12], %18 {strides = array<i32>} : memref<1x128xf32, #tpu.memory_space<vmem>>, vector<1x128xf32>,
    %c0_13 = arith.constant 0 : index
    %c0_14 = arith.constant 0 : index
    %20 = vector.load %arg6[%c0_13, %c0_14] : memref<1x128xf32, #tpu.memory_space<vmem>>, vector<1x128xf32>
    %cst_15 = arith.constant dense<0.000000e+00> : vector<128xf32>
    %21 = vector.multi_reduction <add>, %13, %cst_15 [0] : vector<8x128xf32> to vector<128xf32>
    %22 = vector.shape_cast %21 : vector<128xf32> to vector<1x128xf32>
    %23 = arith.addf %20, %22 : vector<1x128xf32>
    %c0_16 = arith.constant 0 : index
    %c0_17 = arith.constant 0 : index
    %24 = vector.load %arg6[%c0_16, %c0_17] : memref<1x128xf32, #tpu.memory_space<vmem>>, vector<1x128xf32>
    tpu.vector_store %arg6[%c0_16, %c0_17], %23 {strides = array<i32>} : memref<1x128xf32, #tpu.memory_space<vmem>>, vector<1x128xf32>,
    %c0_18 = arith.constant 0 : index
    %c0_19 = arith.constant 0 : index
    %25 = vector.load %arg7[%c0_18, %c0_19] : memref<1x128xf32, #tpu.memory_space<vmem>>, vector<1x128xf32>
    %cst_20 = arith.constant dense<0.000000e+00> : vector<128xf32>
    %26 = vector.multi_reduction <add>, %6, %cst_20 [0] : vector<8x128xf32> to vector<128xf32>
    %27 = vector.shape_cast %26 : vector<128xf32> to vector<1x128xf32>
    %28 = arith.addf %25, %27 : vector<1x128xf32>
    %c0_21 = arith.constant 0 : index
    %c0_22 = arith.constant 0 : index
    %29 = vector.load %arg7[%c0_21, %c0_22] : memref<1x128xf32, #tpu.memory_space<vmem>>, vector<1x128xf32>
    tpu.vector_store %arg7[%c0_21, %c0_22], %28 {strides = array<i32>} : memref<1x128xf32, #tpu.memory_space<vmem>>, vector<1x128xf32>,
    %c0_i32_23 = arith.constant 0 : i32
    %30 = arith.cmpi eq, %arg1, %c0_i32_23 : i32
    %31 = arith.extui %30 : i1 to i32
    %c0_i32_24 = arith.constant 0 : i32
    %32 = arith.cmpi ne, %31, %c0_i32_24 : i32
    scf.if %32 {
      %c0_25 = arith.constant 0 : index
      %c0_26 = arith.constant 0 : index
      %33 = vector.load %arg5[%c0_25, %c0_26] : memref<1x128xf32, #tpu.memory_space<vmem>>, vector<1x128xf32>
      %34 = vector.shape_cast %33 : vector<1x128xf32> to vector<1x1x128xf32>
      %cst_27 = arith.constant dense<0.000000e+00> : vector<1xf32>
      %35 = vector.multi_reduction <add>, %34, %cst_27 [1, 2] : vector<1x1x128xf32> to vector<1xf32>
      %36 = vector.shape_cast %35 : vector<1xf32> to vector<1x1x1xf32>
      %37 = vector.extract %36[0, 0, 0] : f32 from vector<1x1x1xf32>
      %c0_28 = arith.constant 0 : index
      %c0_29 = arith.constant 0 : index
      %38 = vector.load %arg6[%c0_28, %c0_29] : memref<1x128xf32, #tpu.memory_space<vmem>>, vector<1x128xf32>
      %39 = vector.shape_cast %38 : vector<1x128xf32> to vector<1x1x128xf32>
      %cst_30 = arith.constant dense<0.000000e+00> : vector<1xf32>
      %40 = vector.multi_reduction <add>, %39, %cst_30 [1, 2] : vector<1x1x128xf32> to vector<1xf32>
      %41 = vector.shape_cast %40 : vector<1xf32> to vector<1x1x1xf32>
      %42 = vector.extract %41[0, 0, 0] : f32 from vector<1x1x1xf32>
      %c0_31 = arith.constant 0 : index
      %c0_32 = arith.constant 0 : index
      %43 = vector.load %arg7[%c0_31, %c0_32] : memref<1x128xf32, #tpu.memory_space<vmem>>, vector<1x128xf32>
      %44 = vector.shape_cast %43 : vector<1x128xf32> to vector<1x1x128xf32>
      %cst_33 = arith.constant dense<0.000000e+00> : vector<1xf32>
      %45 = vector.multi_reduction <add>, %44, %cst_33 [1, 2] : vector<1x1x128xf32> to vector<1xf32>
      %46 = vector.shape_cast %45 : vector<1xf32> to vector<1x1x1xf32>
      %47 = vector.extract %46[0, 0, 0] : f32 from vector<1x1x1xf32>
      %cst_34 = arith.constant 1.000000e+00 : f32
      %48 = arith.addf %37, %cst_34 : f32
      %cst_35 = arith.constant 2.000000e+00 : f32
      %49 = arith.mulf %cst_35, %48 : f32
      %50 = arith.addf %42, %47 : f32
      %cst_36 = arith.constant 1.000000e+00 : f32
      %51 = arith.addf %50, %cst_36 : f32
      %52 = arith.divf %49, %51 : f32
      %53 = vector.broadcast %52 : f32 to vector<1x8x128xf32>
      %c0_37 = arith.constant 0 : index
      %c0_38 = arith.constant 0 : index
      %c0_39 = arith.constant 0 : index
      %54 = vector.load %arg4[%c0_37, %c0_38, %c0_39] : memref<1x8x128xf32, #tpu.memory_space<vmem>>, vector<1x8x128xf32>
      tpu.vector_store %arg4[%c0_37, %c0_38, %c0_39], %53 {strides = array<i32>} : memref<1x8x128xf32, #tpu.memory_space<vmem>>, vector<1x8x128xf32>,
    } else {
    }
    return
  }
  func.func @transform_0(%arg0: i32, %arg1: i32) -> (i32, i32, i32) {
    %c0_i32 = arith.constant 0 : i32
    %c0_i32_0 = arith.constant 0 : i32
    return %arg0, %arg1, %c0_i32 : i32, i32, i32
  }
  func.func @transform_1(%arg0: i32, %arg1: i32) -> (i32, i32, i32) {
    %c0_i32 = arith.constant 0 : i32
    %c0_i32_0 = arith.constant 0 : i32
    return %arg0, %arg1, %c0_i32 : i32, i32, i32
  }
  func.func @transform_2(%arg0: i32, %arg1: i32) -> (i32, i32, i32) {
    %c0_i32 = arith.constant 0 : i32
    %c0_i32_0 = arith.constant 0 : i32
    %c0_i32_1 = arith.constant 0 : i32
    return %arg0, %c0_i32, %c0_i32_0 : i32, i32, i32
  }
}

</mosaic_0001>

<llo_original>
// kernel: soft_dice_loss.1
$region0: #{soft_dice_loss.1}
  #allocation0 [shape = 'u32[]', space=smem, size = 0x4, offset = 0x4, fixed_abs, tag = 'smem constant byte address 0x4 - core index']
  #allocation1 [shape = 'u32[144,128]{1,0:T(1,128)}', space=vmem, size = 0x12000, scoped, tag = 'internal scratch']
  #allocation2 [shape = 'f32[1,128]{1,0:T(1,128)}', space=vmem, size = 0x200, scoped, tag = 'scratch operand']
  #allocation3 [shape = 'f32[1,128]{1,0:T(1,128)}', space=vmem, size = 0x200, scoped, tag = 'scratch operand']
  #allocation4 [shape = 'f32[1,128]{1,0:T(1,128)}', space=vmem, size = 0x200, scoped, tag = 'scratch operand']
  %s0 = inlined_call_operand.vmem [shape: f32[2,8,128], index: 0, kind: input, shape index: {}]
  %s1 = inlined_call_operand.vmem [shape: f32[2,8,128], index: 1, kind: input, shape index: {}]
  %s2 = inlined_call_operand.vmem [shape: f32[2,8,128], index: 2, kind: output, shape index: {}]
  %s3 = sld [smem:[#allocation0]]
  $region49: #{soft_dice_loss.1} parent=0
    _
  %s5 = ssub.s32 1, %s3
  %s6 = scalar_select 0, %s5, %s3
  loop: start=0, step=1, limit=4
  $region2: #{soft_dice_loss.1} parent=0 // loop_pre_header
    _
  $region3: #{soft_dice_loss.1} parent=0 // loop_header
    %s8 = sphi 0, %s12
    %p9 = scmp.ge.s32.totalorder %s8, 4
    %s15 = sphi 0, %s27
    %s16 = sphi 0, %s23
    %s17 = sphi 0, %s15
    %s18 = sphi 0, %s16
    %s19 = sphi 0, %s17
    %s20 = sphi 0, %s18
    %s32 = sphi 0, %s34
    %s35 = sphi 0, %s32
    %s36 = sphi 0, %s35
    %s52 = sphi 0, %s36
    %s60 = sphi 0, %s62
    %s63 = sphi 0, %s60
    %s64 = sphi 0, %s63
    %s80 = sphi 0, %s64
    %s86 = sphi 0, %s88
    %s89 = sphi 0, %s86
    %s90 = sphi 0, %s89
    %s106 = sphi 0, %s90
  $region4: #{soft_dice_loss.1} parent=0 // loop_header_branch
    %11 = sbr.rel (%p9) target = $region8
  $region5: #{soft_dice_loss.1} parent=0 // loop_body
    %s13 = ssub.s32 %s8, 1
    %s14 = ssub.s32 %s8, 2
    %s21 = sadd.s32 1, %s16
    %p22 = scmp.ge.s32.totalorder %s21, 1
    %s23 = scalar_select %p22, 0, %s21
    %s24 = sadd.s32 1, %s15
    %s25 = scalar_select %p22, %s24, %s15
    %p26 = scmp.ge.s32.totalorder %s25, 2
    %s27 = scalar_select %p26, 0, %s25
    %s28 = ssub.s32 %s15, %s27
    %s29 = ssub.s32 %s16, %s23
    %s30 = sor.u32 %s28, %s29
    %p31 = scmp.eq.s32.totalorder %s30, 0
    %s33 = sadd.s32 %s32, 1
    %s34 = scalar_select %p31, %s32, %s33
    %p37 = pneg %p31
    %p38 = scmp.eq.s32.totalorder %s8, 1
    %p39 = por %p37, %p38
    %p40 = scmp.ne.s32.totalorder %s32, %s35
    %p41 = scmp.eq.s32.totalorder %s8, 0
    %p42 = por %p40, %p41
    %p43 = scmp.ne.s32.totalorder %s32, %s35
    %p44 = scmp.eq.s32.totalorder %s13, 1
    %p45 = por %p43, %p44
    %p46 = scmp.ne.s32.totalorder %s35, %s36
    %p47 = scmp.eq.s32.totalorder %s13, 0
    %p48 = por %p46, %p47
    %p49 = scmp.ne.s32.totalorder %s35, %s36
    %p50 = scmp.eq.s32.totalorder %s14, 1
    %p51 = por %p49, %p50
    %p53 = scmp.ne.s32.totalorder %s36, %s52
    %p54 = scmp.eq.s32.totalorder %s14, 0
    %p55 = por %p53, %p54
    %s56 = ssub.s32 %s15, %s27
    %s57 = ssub.s32 %s16, %s23
    %s58 = sor.u32 %s56, %s57
    %p59 = scmp.eq.s32.totalorder %s58, 0
    %s61 = sadd.s32 %s60, 1
    %s62 = scalar_select %p59, %s60, %s61
    %p65 = pneg %p59
    %p66 = scmp.eq.s32.totalorder %s8, 1
    %p67 = por %p65, %p66
    %p68 = scmp.ne.s32.totalorder %s60, %s63
    %p69 = scmp.eq.s32.totalorder %s8, 0
    %p70 = por %p68, %p69
    %p71 = scmp.ne.s32.totalorder %s60, %s63
    %p72 = scmp.eq.s32.totalorder %s13, 1
    %p73 = por %p71, %p72
    %p74 = scmp.ne.s32.totalorder %s63, %s64
    %p75 = scmp.eq.s32.totalorder %s13, 0
    %p76 = por %p74, %p75
    %p77 = scmp.ne.s32.totalorder %s63, %s64
    %p78 = scmp.eq.s32.totalorder %s14, 1
    %p79 = por %p77, %p78
    %p81 = scmp.ne.s32.totalorder %s64, %s80
    %p82 = scmp.eq.s32.totalorder %s14, 0
    %p83 = por %p81, %p82
    %s84 = ssub.s32 %s15, %s27
    %p85 = scmp.eq.s32.totalorder %s84, 0
    %s87 = sadd.s32 %s86, 1
    %s88 = scalar_select %p85, %s86, %s87
    %p91 = pneg %p85
    %p92 = scmp.eq.s32.totalorder %s8, 1
    %p93 = por %p91, %p92
    %p94 = scmp.ne.s32.totalorder %s86, %s89
    %p95 = scmp.eq.s32.totalorder %s8, 0
    %p96 = por %p94, %p95
    %p97 = scmp.ne.s32.totalorder %s86, %s89
    %p98 = scmp.eq.s32.totalorder %s13, 1
    %p99 = por %p97, %p98
    %p100 = scmp.ne.s32.totalorder %s89, %s90
    %p101 = scmp.eq.s32.totalorder %s13, 0
    %p102 = por %p100, %p101
    %p103 = scmp.ne.s32.totalorder %s89, %s90
    %p104 = scmp.eq.s32.totalorder %s14, 1
    %p105 = por %p103, %p104
    %p107 = scmp.ne.s32.totalorder %s90, %s106
    %p108 = scmp.eq.s32.totalorder %s14, 0
    %p109 = por %p107, %p108
    %p110 = scmp.le.s32.totalorder 1, %s8
    %p111 = scmp.lt.s32.totalorder %s8, 3
    %p112 = pnand %p110, %p111
    %p113 = pneg %p112
    // Predicated region
    $region9: #{soft_dice_loss.1} parent=5 // pred_check
      _
    $region10: #{soft_dice_loss.1} parent=5 // pred_check_branch
      %115 = sbr.rel (%p112) target = $region12
    $region11: #{soft_dice_loss.1} parent=5 // pred_region
      %s116 = ssub.s32 %s8, 1
    $region12: #{soft_dice_loss.1} parent=5 // pred_fallthru
      _
    %p117 = scmp.lt.s32.totalorder %s8, 2
    // Predicated region
    $region13: #{soft_dice_loss.1} parent=5 // pred_check
      %p118 = pneg %p117
    $region14: #{soft_dice_loss.1} parent=5 // pred_check_branch
      %120 = sbr.rel (%p118) target = $region16
    $region15: #{soft_dice_loss.1} parent=5 // pred_region
      // Predicated region
      $region17: #{soft_dice_loss.1} parent=15 // pred_check
        %p121 = pneg %p42
      $region18: #{soft_dice_loss.1} parent=15 // pred_check_branch
        %123 = sbr.rel (%p121) target = $region20
      $region19: #{soft_dice_loss.1} parent=15 // pred_region
        %p124 = scmp.lt.s32.totalorder %s15, 1
        %s125 = scalar_select %p124, %s15, 1
        %p126 = scmp.lt.s32.totalorder %s16, 0
        %s127 = scalar_select %p126, %s16, 0
        %s128 = sadd.s32 %s127, %s125
        %s129 = smul.addr %s128, 8
        %s130 = scalar_lea.vmem %s0, %s129
      $region20: #{soft_dice_loss.1} parent=15 // pred_fallthru
        _
      // Predicated region
      $region21: #{soft_dice_loss.1} parent=15 // pred_check
        %p131 = pneg %p70
      $region22: #{soft_dice_loss.1} parent=15 // pred_check_branch
        %133 = sbr.rel (%p131) target = $region24
      $region23: #{soft_dice_loss.1} parent=15 // pred_region
        %p134 = scmp.lt.s32.totalorder %s15, 1
        %s135 = scalar_select %p134, %s15, 1
        %p136 = scmp.lt.s32.totalorder %s16, 0
        %s137 = scalar_select %p136, %s16, 0
        %s138 = sadd.s32 %s137, %s135
        %s139 = smul.addr %s138, 8
        %s140 = scalar_lea.vmem %s1, %s139
      $region24: #{soft_dice_loss.1} parent=15 // pred_fallthru
        _
    $region16: #{soft_dice_loss.1} parent=5 // pred_fallthru
      _
    %p141 = scmp.le.s32.totalorder 1, %s8
    %p142 = scmp.lt.s32.totalorder %s8, 3
    %p143 = pnand %p141, %p142
    %p144 = pneg %p143
    // Predicated region
    $region25: #{soft_dice_loss.1} parent=5 // pred_check
      _
    $region26: #{soft_dice_loss.1} parent=5 // pred_check_branch
      %146 = sbr.rel (%p143) target = $region28
    $region27: #{soft_dice_loss.1} parent=5 // pred_region
      %s147 = ssub.s32 %s8, 1
      %p148 = scmp.lt.s32.totalorder %s17, 1
      %s149 = scalar_select %p148, %s17, 1
      %p150 = scmp.lt.s32.totalorder %s18, 0
      %s151 = scalar_select %p150, %s18, 0
      %s152 = sadd.s32 %s151, %s149
      %s153 = smul.addr %s152, 8
      %s154 = scalar_lea.vmem %s0, %s153
      %p155 = pneg %p48
      %p156 = pneg %p45
      %p157 = scmp.lt.s32.totalorder %s17, 1
      %s158 = scalar_select %p157, %s17, 1
      %p159 = scmp.lt.s32.totalorder %s18, 0
      %s160 = scalar_select %p159, %s18, 0
      %s161 = sadd.s32 %s160, %s158
      %s162 = smul.addr %s161, 8
      %s163 = scalar_lea.vmem %s1, %s162
      %p164 = pneg %p76
      %p165 = pneg %p73
      %p166 = pneg %p102
      %p167 = pneg %p99
      %p168 = scmp.lt.s32.totalorder %s17, 1
      %s169 = scalar_select %p168, %s17, 1
      %s170 = smul.addr %s169, 8
      %s171 = scalar_lea.vmem %s2, %s170
      %p172 = scmp.lt.s32.totalorder %s17, 1
      %s173 = scalar_select %p172, %s17, 1
      %p174 = scmp.lt.s32.totalorder %s18, 0
      %s175 = scalar_select %p174, %s18, 0
      %s176 = sadd.s32 %s175, %s173
      %s177 = smul.addr %s176, 8
      %s178 = scalar_lea.vmem %s0, %s177
      %p179 = scmp.lt.s32.totalorder %s17, 1
      %s180 = scalar_select %p179, %s17, 1
      %p181 = scmp.lt.s32.totalorder %s18, 0
      %s182 = scalar_select %p181, %s18, 0
      %s183 = sadd.s32 %s182, %s180
      %s184 = smul.addr %s183, 8
      %s185 = scalar_lea.vmem %s1, %s184
      %p186 = scmp.lt.s32.totalorder %s17, 1
      %s187 = scalar_select %p186, %s17, 1
      %s188 = smul.addr %s187, 8
      %s189 = scalar_lea.vmem %s2, %s188
      %p190 = scmp.eq.s32.totalorder %s18, 0
      // Predicated region
      $region29: #{soft_dice_loss.1} parent=27 // pred_check
        %p191 = pneg %p190
      $region30: #{soft_dice_loss.1} parent=27 // pred_check_branch
        %193 = sbr.rel (%p191) target = $region32
      $region31: #{soft_dice_loss.1} parent=27 // pred_region
        %194 = vst [vmem:[#allocation2] sm:$0x1] 0.0
        %195 = vst [vmem:[#allocation3] sm:$0x1] 0.0
        %196 = vst [vmem:[#allocation4] sm:$0x1] 0.0
      $region32: #{soft_dice_loss.1} parent=27 // pred_fallthru
        _
      %v197 = vld [vmem:[%s178] sm:$0xff]
      %v198 = vld [vmem:[%s185] sm:$0xff]
      %v199 = vmul.f32 %v197, 0.5
      %v200 = vtanh.pop %v199
      %v201 = vmul.f32 %v200, 0.5
      %v202 = vadd.f32 %v201, 0.5
      %v203 = vld [vmem:[#allocation2] sm:$0x1]
      %v204 = vmul.f32 %v202, %v198
      %v205 = vrot.slane %v204, 4
      %v206 = vadd.f32 %v204, %v205
      %v207 = vrot.slane %v206, 2
      %v208 = vadd.f32 %v206, %v207
      %v209 = vrot.slane %v208, 1
      %v210 = vadd.f32 %v208, %v209
      %v211 = vadd.f32 %v203, %v210
      %212 = vst [vmem:[#allocation2] sm:$0x1] %v211
      %v213 = vld [vmem:[#allocation3] sm:$0x1]
      %v214 = vrot.slane %v202, 4
      %v215 = vadd.f32 %v202, %v214
      %v216 = vrot.slane %v215, 2
      %v217 = vadd.f32 %v215, %v216
      %v218 = vrot.slane %v217, 1
      %v219 = vadd.f32 %v217, %v218
      %v220 = vadd.f32 %v213, %v219
      %221 = vst [vmem:[#allocation3] sm:$0x1] %v220
      %v222 = vld [vmem:[#allocation4] sm:$0x1]
      %v223 = vrot.slane %v198, 4
      %v224 = vadd.f32 %v198, %v223
      %v225 = vrot.slane %v224, 2
      %v226 = vadd.f32 %v224, %v225
      %v227 = vrot.slane %v226, 1
      %v228 = vadd.f32 %v226, %v227
      %v229 = vadd.f32 %v222, %v228
      %230 = vst [vmem:[#allocation4] sm:$0x1] %v229
      // Predicated region
      $region33: #{soft_dice_loss.1} parent=27 // pred_check
        %p231 = pneg %p190
      $region34: #{soft_dice_loss.1} parent=27 // pred_check_branch
        %233 = sbr.rel (%p231) target = $region36
      $region35: #{soft_dice_loss.1} parent=27 // pred_region
        %v234 = vld [vmem:[#allocation2] sm:$0x1]
        %vm235 = vcmask 1040384
        %v236 = vsel %vm235, %v234, 0.0
        %237 = vadd.xlane.f32.xlu0 %v236
        %v238 = vpop.xlane.xlu0 %237
        %v239 = vrot.slane %v238, 4
        %v240 = vadd.f32 %v238, %v239
        %v241 = vrot.slane %v240, 2
        %v242 = vadd.f32 %v240, %v241
        %v243 = vrot.slane %v242, 1
        %v244 = vadd.f32 %v242, %v243
        %s245 = vtos %v244
        %v246 = vld [vmem:[#allocation3] sm:$0x1]
        %v247 = vsel %vm235, %v246, 0.0
        %248 = vadd.xlane.f32.xlu0 %v247
        %v249 = vpop.xlane.xlu0 %248
        %v250 = vrot.slane %v249, 4
        %v251 = vadd.f32 %v249, %v250
        %v252 = vrot.slane %v251, 2
        %v253 = vadd.f32 %v251, %v252
        %v254 = vrot.slane %v253, 1
        %v255 = vadd.f32 %v253, %v254
        %s256 = vtos %v255
        %v257 = vld [vmem:[#allocation4] sm:$0x1]
        %v258 = vsel %vm235, %v257, 0.0
        %259 = vadd.xlane.f32.xlu0 %v258
        %v260 = vpop.xlane.xlu0 %259
        %v261 = vrot.slane %v260, 4
        %v262 = vadd.f32 %v260, %v261
        %v263 = vrot.slane %v262, 2
        %v264 = vadd.f32 %v262, %v263
        %v265 = vrot.slane %v264, 1
        %v266 = vadd.f32 %v264, %v265
        %s267 = vtos %v266
        %s268 = sadd.f32 %s245, 1.0
        %s269 = smul.f32 %s268, 2.0
        %s270 = sadd.f32 %s256, %s267
        %s271 = sadd.f32 %s270, 1.0
        %v272 = vstv %s271
        %v273 = vrcp.pop %v272
        %s274 = vtos %v273
        %s275 = smul.f32 %s269, %s274
        %v276 = vstv %s275
        %277 = vst [vmem:[%s189] sm:$0xff] %v276
      $region36: #{soft_dice_loss.1} parent=27 // pred_fallthru
        _
      %p278 = scmp.lt.s32.totalorder %s17, 1
      %s279 = scalar_select %p278, %s17, 1
      %s280 = smul.addr %s279, 8
      %s281 = scalar_lea.vmem %s2, %s280
      // Predicated region
      $region37: #{soft_dice_loss.1} parent=27 // pred_check
        %p282 = pneg %p99
      $region38: #{soft_dice_loss.1} parent=27 // pred_check_branch
        %284 = sbr.rel (%p282) target = $region40
      $region39: #{soft_dice_loss.1} parent=27 // pred_region
        _
      $region40: #{soft_dice_loss.1} parent=27 // pred_fallthru
        _
    $region28: #{soft_dice_loss.1} parent=5 // pred_fallthru
      _
    %p285 = scmp.le.s32.totalorder 2, %s8
    // Predicated region
    $region41: #{soft_dice_loss.1} parent=5 // pred_check
      %p286 = pneg %p285
    $region42: #{soft_dice_loss.1} parent=5 // pred_check_branch
      %288 = sbr.rel (%p286) target = $region44
    $region43: #{soft_dice_loss.1} parent=5 // pred_region
      %s289 = ssub.s32 %s8, 2
      // Predicated region
      $region45: #{soft_dice_loss.1} parent=43 // pred_check
        %p290 = pneg %p105
      $region46: #{soft_dice_loss.1} parent=43 // pred_check_branch
        %292 = sbr.rel (%p290) target = $region48
      $region47: #{soft_dice_loss.1} parent=43 // pred_region
        %p293 = scmp.lt.s32.totalorder %s19, 1
        %s294 = scalar_select %p293, %s19, 1
        %s295 = smul.addr %s294, 8
        %s296 = scalar_lea.vmem %s2, %s295
      $region48: #{soft_dice_loss.1} parent=43 // pred_fallthru
        _
    $region44: #{soft_dice_loss.1} parent=5 // pred_fallthru
      _
  $region6: #{soft_dice_loss.1} parent=0 // loop_footer
    %s12 = sadd.s32 1, %s8
  $region7: #{soft_dice_loss.1} parent=0 // loop_footer_branch
    %7 = sbr.rel target = $region3
  $region8: #{soft_dice_loss.1} parent=0 // loop_exit
    _

</llo_original>
